<compile_context>
chip_gen: v5e
topology: v5e:2x2
jax: 0.10.0
libtpu: 0.0.40
codegen_flags: <defaults>
</compile_context>

<pallas_src>
import functools

import jax
import jax.numpy as jnp
from jax.experimental import pallas as pl
from jax.experimental.pallas import tpu as pltpu


def _partial_sums_kernel(pred_ref, true_ref,
                         pos_sum_ref, neg_sum_ref, pos_cnt_ref, neg_cnt_ref,
                         *, n_rows, block_rows, blocks_per_split,
                         acc_rows, need_mask):
    j = pl.program_id(2)

    @pl.when(j == 0)
    def _():
        pos_sum_ref[...] = jnp.zeros_like(pos_sum_ref)
        neg_sum_ref[...] = jnp.zeros_like(neg_sum_ref)
        pos_cnt_ref[...] = jnp.zeros_like(pos_cnt_ref)
        neg_cnt_ref[...] = jnp.zeros_like(neg_cnt_ref)

    p = pred_ref[0]          # (block_rows, 128), native dtype (f32 / bf16)
    t = true_ref[0]          # native dtype (f32 / bf16 / int8 / int32)

    if need_mask:
        # Only compiled in when r % block_rows != 0.  Zero the label rows of
        # the (single) partial trailing block: one compare + one select.
        s = pl.program_id(1)
        limit = n_rows - (s * blocks_per_split + j) * block_rows
        row = jax.lax.broadcasted_iota(jnp.int32, (block_rows, 128), 0)
        t = jnp.where(row < limit, t, jnp.zeros_like(t))

    # Native-dtype label compares (no int8 -> int32 widening).
    is_pos = t == 1
    is_neg = t == 2

    # |mask - p*mask| == mask * |1 - p|.  Elementwise math stays in pred's
    # native dtype; single f32 cast feeding the accumulators.  where-selects
    # ensure garbage values in padded regions can never leak NaN/Inf.
    a = jnp.abs(1.0 - p).astype(jnp.float32)
    zero = jnp.zeros_like(a)

    def accumulate(ref, x):
        # (block_rows,128) -> (block_rows/acc_rows, acc_rows, 128) is a
        # layout-preserving regroup when acc_rows == 8; reducing axis 0 is
        # full-vreg VALU adds (no per-step intra-vreg sublane reduce).
        ref[0, 0] += jnp.sum(x.reshape(-1, acc_rows, 128), axis=0)

    accumulate(pos_sum_ref, jnp.where(is_pos, a, zero))
    accumulate(neg_sum_ref, jnp.where(is_neg, a, zero))
    accumulate(pos_cnt_ref, is_pos.astype(jnp.float32))
    accumulate(neg_cnt_ref, is_neg.astype(jnp.float32))
    # TODO(synk): if bundle analysis shows VALU is binding (bf16/int8 inputs on
    # v6e/v7x), offload these four reductions to the idle MXU via
    # jnp.dot(ones((8, block_rows)), masked_block, preferred_element_type=f32).


def partial_loss(pred, true, w1=1.0, w2=0.1, max_block_rows=4096):
    """Pallas TPU version of the `partial` loss forward pass."""
    bs = pred.shape[0]
    lanes = 128

    pred2 = pred.reshape(bs, -1)            # free view on contiguous input
    true2 = true.reshape(bs, -1)
    n = pred2.shape[1]

    n_pad = pl.cdiv(n, lanes) * lanes
    if n_pad != n:
        # Label 0 (pad) is ignored by the loss, so zero padding is exact.
        # TODO(synk): handle the ragged lane tail in-kernel instead of this
        # extra HBM pad pass (only hit when N % 128 != 0).
        pad = ((0, 0), (0, n_pad - n))
        pred2 = jnp.pad(pred2, pad)
        true2 = jnp.pad(true2, pad)

    r = n_pad // lanes
    pred3 = pred2.reshape(bs, r, lanes)     # free (row-major) view
    true3 = true2.reshape(bs, r, lanes)

    # ---- tile selection --------------------------------------------------
    if r <= max_block_rows:
        block_rows = r                       # full axis -> always legal block
    else:
        cap = max(32, (max_block_rows // 32) * 32)   # 32 = lcm(f32/bf16/int8)
        block_rows = 0
        for cand in range(cap, 31, -32):     # prefer a divisor of r -> no mask
            if r % cand == 0:
                block_rows = cand
                break
        if block_rows == 0:
            block_rows = cap
    n_blocks = pl.cdiv(r, block_rows)
    need_mask = (r % block_rows) != 0
    acc_rows = 8 if block_rows % 8 == 0 else 1

    # Split the row-block reduction so both v7x TensorCores stay busy when the
    # batch axis alone cannot feed them.  Harmless (purely sequential) on
    # single-TC chips (v5e/v6e).
    n_splits = 2 if (bs == 1 and n_blocks >= 2 and n_blocks % 2 == 0) else 1
    blocks_per_split = n_blocks // n_splits

    kernel = functools.partial(
        _partial_sums_kernel,
        n_rows=r, block_rows=block_rows, blocks_per_split=blocks_per_split,
        acc_rows=acc_rows, need_mask=need_mask)

    acc_shape = jax.ShapeDtypeStruct((bs, n_splits, acc_rows, lanes),
                                     jnp.float32)
    acc_spec = pl.BlockSpec((1, 1, acc_rows, lanes),
                            lambda b, s, j: (b, s, 0, 0))
    in_spec = pl.BlockSpec((1, block_rows, lanes),
                           lambda b, s, j: (b, s * blocks_per_split + j, 0))

    pos_sum, neg_sum, pos_cnt, neg_cnt = pl.pallas_call(
        kernel,
        out_shape=(acc_shape, acc_shape, acc_shape, acc_shape),
        grid_spec=pltpu.PrefetchScalarGridSpec(
            num_scalar_prefetch=0,
            grid=(bs, n_splits, blocks_per_split),
            in_specs=[in_spec, in_spec],
            out_specs=(acc_spec, acc_spec, acc_spec, acc_spec),
        ),
        compiler_params=pltpu.CompilerParams(
            dimension_semantics=("parallel", "parallel", "arbitrary"),
        ),
    )(pred3, true3)

    # Tiny JAX epilogue: combine per-(row, split) partials, divide, weight,
    # and take the batch mean.  Division by zero (no 1s / no 2s in a row)
    # intentionally matches the PyTorch reference (Inf/NaN).
    ps = jnp.sum(pos_sum, axis=(1, 2, 3))
    ns = jnp.sum(neg_sum, axis=(1, 2, 3))
    pc = jnp.sum(pos_cnt, axis=(1, 2, 3))
    nc = jnp.sum(neg_cnt, axis=(1, 2, 3))
    return jnp.mean(w1 * (ps / pc) + w2 * (ns / nc))


def _reference(pred, true, w1=1.0, w2=0.1):
    bs = pred.shape[0]
    pred = pred.reshape(bs, -1).astype(jnp.float32)
    true = true.reshape(bs, -1)
    pos = (true == 1).astype(jnp.float32)
    neg = (true == 2).astype(jnp.float32)
    pos_loss = jnp.sum(jnp.abs(pos - pred * pos), axis=1) / jnp.sum(pos, axis=1)
    neg_loss = jnp.sum(jnp.abs(neg - pred * neg), axis=1) / jnp.sum(neg, axis=1)
    return jnp.mean(w1 * pos_loss + w2 * neg_loss)


if __name__ == "__main__":
    key = jax.random.PRNGKey(0)
    k1, k2 = jax.random.split(key)

    # Small NCHW-shaped inputs, consistent with a segmentation-style loss.
    B, C, H, W = 2, 4, 16, 16
    pred = jax.random.uniform(k1, (B, C, H, W), dtype=jnp.float32)
    # Labels in {0, 1, 2}: 1 = positive, 2 = negative, 0 = ignored.
    labels_i32 = jax.random.randint(k2, (B, C, H, W), 0, 3)
    true_f32 = labels_i32.astype(jnp.float32)

    # Check 1: f32 pred + f32 labels (matches the PyTorch usage).
    loss = jax.block_until_ready(partial_loss(pred, true_f32, w1=1.0, w2=0.1))
    ref = jax.block_until_ready(_reference(pred, true_f32, w1=1.0, w2=0.1))
    assert jnp.allclose(loss, ref, rtol=1e-5, atol=1e-5), (loss, ref)

    # Check 2: bandwidth-friendly dtypes (bf16 pred, int8 labels) stream
    # natively; elementwise math runs in bf16 so compare with a tolerance
    # appropriate for bf16 inputs.
    pred_bf16 = pred.astype(jnp.bfloat16)
    true_i8 = labels_i32.astype(jnp.int8)
    loss2 = jax.block_until_ready(partial_loss(pred_bf16, true_i8, w1=1.0, w2=0.1))
    ref2 = jax.block_until_ready(_reference(pred_bf16, true_i8, w1=1.0, w2=0.1))
    assert jnp.allclose(loss2, ref2, rtol=2e-3, atol=1e-4), (loss2, ref2)

    print("KERNEL_OK")
</pallas_src>

<mosaic_0001>
module attributes {stable_mosaic.version = 11 : i64} {
  func.func @_partial_sums_kernel(%arg0: i32, %arg1: i32, %arg2: i32, %arg3: memref<1x8x128xf32, #tpu.memory_space<vmem>>, %arg4: memref<1x8x128xf32, #tpu.memory_space<vmem>>, %arg5: memref<1x1x8x128xf32, #tpu.memory_space<vmem>>, %arg6: memref<1x1x8x128xf32, #tpu.memory_space<vmem>>, %arg7: memref<1x1x8x128xf32, #tpu.memory_space<vmem>>, %arg8: memref<1x1x8x128xf32, #tpu.memory_space<vmem>>) attributes {dimension_semantics = [#tpu.dimension_semantics<parallel>, #tpu.dimension_semantics<parallel>, #tpu.dimension_semantics<arbitrary>], iteration_bounds = array<i64: 2, 1, 1>, scalar_prefetch = 0 : i64, scratch_operands = 0 : i64, tpu.core_type = #tpu.core_type<tc>, window_params = [{transform_indices = @transform_0, window_bounds = array<i64: 1, 8, 128>}, {transform_indices = @transform_1, window_bounds = array<i64: 1, 8, 128>}, {transform_indices = @transform_2, window_bounds = array<i64: 1, 1, 8, 128>}, {transform_indices = @transform_3, window_bounds = array<i64: 1, 1, 8, 128>}, {transform_indices = @transform_4, window_bounds = array<i64: 1, 1, 8, 128>}, {transform_indices = @transform_5, window_bounds = array<i64: 1, 1, 8, 128>}]} {
    %c0_i32 = arith.constant 0 : i32
    %0 = arith.cmpi eq, %arg2, %c0_i32 : i32
    %1 = arith.extui %0 : i1 to i32
    %c0_i32_0 = arith.constant 0 : i32
    %2 = arith.cmpi ne, %1, %c0_i32_0 : i32
    scf.if %2 {
      %cst_45 = arith.constant 0.000000e+00 : f32
      %53 = vector.broadcast %cst_45 : f32 to vector<1x1x8x128xf32>
      %c0_46 = arith.constant 0 : index
      %c0_47 = arith.constant 0 : index
      %c0_48 = arith.constant 0 : index
      %c0_49 = arith.constant 0 : index
      %54 = vector.load %arg5[%c0_46, %c0_47, %c0_48, %c0_49] : memref<1x1x8x128xf32, #tpu.memory_space<vmem>>, vector<1x1x8x128xf32>
      tpu.vector_store %arg5[%c0_46, %c0_47, %c0_48, %c0_49], %53 {strides = array<i32>} : memref<1x1x8x128xf32, #tpu.memory_space<vmem>>, vector<1x1x8x128xf32>,
      %cst_50 = arith.constant 0.000000e+00 : f32
      %55 = vector.broadcast %cst_50 : f32 to vector<1x1x8x128xf32>
      %c0_51 = arith.constant 0 : index
      %c0_52 = arith.constant 0 : index
      %c0_53 = arith.constant 0 : index
      %c0_54 = arith.constant 0 : index
      %56 = vector.load %arg6[%c0_51, %c0_52, %c0_53, %c0_54] : memref<1x1x8x128xf32, #tpu.memory_space<vmem>>, vector<1x1x8x128xf32>
      tpu.vector_store %arg6[%c0_51, %c0_52, %c0_53, %c0_54], %55 {strides = array<i32>} : memref<1x1x8x128xf32, #tpu.memory_space<vmem>>, vector<1x1x8x128xf32>,
      %cst_55 = arith.constant 0.000000e+00 : f32
      %57 = vector.broadcast %cst_55 : f32 to vector<1x1x8x128xf32>
      %c0_56 = arith.constant 0 : index
      %c0_57 = arith.constant 0 : index
      %c0_58 = arith.constant 0 : index
      %c0_59 = arith.constant 0 : index
      %58 = vector.load %arg7[%c0_56, %c0_57, %c0_58, %c0_59] : memref<1x1x8x128xf32, #tpu.memory_space<vmem>>, vector<1x1x8x128xf32>
      tpu.vector_store %arg7[%c0_56, %c0_57, %c0_58, %c0_59], %57 {strides = array<i32>} : memref<1x1x8x128xf32, #tpu.memory_space<vmem>>, vector<1x1x8x128xf32>,
      %cst_60 = arith.constant 0.000000e+00 : f32
      %59 = vector.broadcast %cst_60 : f32 to vector<1x1x8x128xf32>
      %c0_61 = arith.constant 0 : index
      %c0_62 = arith.constant 0 : index
      %c0_63 = arith.constant 0 : index
      %c0_64 = arith.constant 0 : index
      %60 = vector.load %arg8[%c0_61, %c0_62, %c0_63, %c0_64] : memref<1x1x8x128xf32, #tpu.memory_space<vmem>>, vector<1x1x8x128xf32>
      tpu.vector_store %arg8[%c0_61, %c0_62, %c0_63, %c0_64], %59 {strides = array<i32>} : memref<1x1x8x128xf32, #tpu.memory_space<vmem>>, vector<1x1x8x128xf32>,
    } else {
    }
    %c0 = arith.constant 0 : index
    %c0_1 = arith.constant 0 : index
    %c0_2 = arith.constant 0 : index
    %3 = vector.load %arg3[%c0, %c0_1, %c0_2] : memref<1x8x128xf32, #tpu.memory_space<vmem>>, vector<1x8x128xf32>
    %4 = vector.shape_cast %3 : vector<1x8x128xf32> to vector<8x128xf32>
    %c0_3 = arith.constant 0 : index
    %c0_4 = arith.constant 0 : index
    %c0_5 = arith.constant 0 : index
    %5 = vector.load %arg4[%c0_3, %c0_4, %c0_5] : memref<1x8x128xf32, #tpu.memory_space<vmem>>, vector<1x8x128xf32>
    %6 = vector.shape_cast %5 : vector<1x8x128xf32> to vector<8x128xf32>
    %cst = arith.constant 1.000000e+00 : f32
    %7 = vector.broadcast %cst : f32 to vector<8x128xf32>
    %8 = arith.cmpf oeq, %6, %7 : vector<8x128xf32>
    %cst_6 = arith.constant 2.000000e+00 : f32
    %9 = vector.broadcast %cst_6 : f32 to vector<8x128xf32>
    %10 = arith.cmpf oeq, %6, %9 : vector<8x128xf32>
    %cst_7 = arith.constant 1.000000e+00 : f32
    %11 = vector.broadcast %cst_7 : f32 to vector<8x128xf32>
    %12 = arith.subf %11, %4 : vector<8x128xf32>
    %13 = math.absf %12 : vector<8x128xf32>
    %cst_8 = arith.constant 0.000000e+00 : f32
    %14 = vector.broadcast %cst_8 : f32 to vector<8x128xf32>
    %15 = arith.select %8, %13, %14 : vector<8x128xi1>, vector<8x128xf32>
    %c0_9 = arith.constant 0 : index
    %c0_10 = arith.constant 0 : index
    %c0_11 = arith.constant 0 : index
    %c0_12 = arith.constant 0 : index
    %16 = vector.load %arg5[%c0_9, %c0_10, %c0_11, %c0_12] : memref<1x1x8x128xf32, #tpu.memory_space<vmem>>, vector<1x1x8x128xf32>
    %17 = vector.shape_cast %16 : vector<1x1x8x128xf32> to vector<8x128xf32>
    %18 = vector.shape_cast %15 : vector<8x128xf32> to vector<1x8x128xf32>
    %cst_13 = arith.constant dense<0.000000e+00> : vector<8x128xf32>
    %19 = vector.multi_reduction <add>, %18, %cst_13 [0] : vector<1x8x128xf32> to vector<8x128xf32>
    %20 = arith.addf %17, %19 : vector<8x128xf32>
    %c0_14 = arith.constant 0 : index
    %c0_15 = arith.constant 0 : index
    %c0_16 = arith.constant 0 : index
    %c0_17 = arith.constant 0 : index
    %21 = vector.load %arg5[%c0_14, %c0_15, %c0_16, %c0_17] : memref<1x1x8x128xf32, #tpu.memory_space<vmem>>, vector<1x1x8x128xf32>
    %22 = vector.shape_cast %21 : vector<1x1x8x128xf32> to vector<8x128xf32>
    %23 = vector.shape_cast %20 : vector<8x128xf32> to vector<1x1x8x128xf32>
    tpu.vector_store %arg5[%c0_14, %c0_15, %c0_16, %c0_17], %23 {strides = array<i32>} : memref<1x1x8x128xf32, #tpu.memory_space<vmem>>, vector<1x1x8x128xf32>,
    %24 = arith.select %10, %13, %14 : vector<8x128xi1>, vector<8x128xf32>
    %c0_18 = arith.constant 0 : index
    %c0_19 = arith.constant 0 : index
    %c0_20 = arith.constant 0 : index
    %c0_21 = arith.constant 0 : index
    %25 = vector.load %arg6[%c0_18, %c0_19, %c0_20, %c0_21] : memref<1x1x8x128xf32, #tpu.memory_space<vmem>>, vector<1x1x8x128xf32>
    %26 = vector.shape_cast %25 : vector<1x1x8x128xf32> to vector<8x128xf32>
    %27 = vector.shape_cast %24 : vector<8x128xf32> to vector<1x8x128xf32>
    %cst_22 = arith.constant dense<0.000000e+00> : vector<8x128xf32>
    %28 = vector.multi_reduction <add>, %27, %cst_22 [0] : vector<1x8x128xf32> to vector<8x128xf32>
    %29 = arith.addf %26, %28 : vector<8x128xf32>
    %c0_23 = arith.constant 0 : index
    %c0_24 = arith.constant 0 : index
    %c0_25 = arith.constant 0 : index
    %c0_26 = arith.constant 0 : index
    %30 = vector.load %arg6[%c0_23, %c0_24, %c0_25, %c0_26] : memref<1x1x8x128xf32, #tpu.memory_space<vmem>>, vector<1x1x8x128xf32>
    %31 = vector.shape_cast %30 : vector<1x1x8x128xf32> to vector<8x128xf32>
    %32 = vector.shape_cast %29 : vector<8x128xf32> to vector<1x1x8x128xf32>
    tpu.vector_store %arg6[%c0_23, %c0_24, %c0_25, %c0_26], %32 {strides = array<i32>} : memref<1x1x8x128xf32, #tpu.memory_space<vmem>>, vector<1x1x8x128xf32>,
    %33 = arith.extui %8 : vector<8x128xi1> to vector<8x128xi32>
    %34 = arith.sitofp %33 : vector<8x128xi32> to vector<8x128xf32>
    %c0_27 = arith.constant 0 : index
    %c0_28 = arith.constant 0 : index
    %c0_29 = arith.constant 0 : index
    %c0_30 = arith.constant 0 : index
    %35 = vector.load %arg7[%c0_27, %c0_28, %c0_29, %c0_30] : memref<1x1x8x128xf32, #tpu.memory_space<vmem>>, vector<1x1x8x128xf32>
    %36 = vector.shape_cast %35 : vector<1x1x8x128xf32> to vector<8x128xf32>
    %37 = vector.shape_cast %34 : vector<8x128xf32> to vector<1x8x128xf32>
    %cst_31 = arith.constant dense<0.000000e+00> : vector<8x128xf32>
    %38 = vector.multi_reduction <add>, %37, %cst_31 [0] : vector<1x8x128xf32> to vector<8x128xf32>
    %39 = arith.addf %36, %38 : vector<8x128xf32>
    %c0_32 = arith.constant 0 : index
    %c0_33 = arith.constant 0 : index
    %c0_34 = arith.constant 0 : index
    %c0_35 = arith.constant 0 : index
    %40 = vector.load %arg7[%c0_32, %c0_33, %c0_34, %c0_35] : memref<1x1x8x128xf32, #tpu.memory_space<vmem>>, vector<1x1x8x128xf32>
    %41 = vector.shape_cast %40 : vector<1x1x8x128xf32> to vector<8x128xf32>
    %42 = vector.shape_cast %39 : vector<8x128xf32> to vector<1x1x8x128xf32>
    tpu.vector_store %arg7[%c0_32, %c0_33, %c0_34, %c0_35], %42 {strides = array<i32>} : memref<1x1x8x128xf32, #tpu.memory_space<vmem>>, vector<1x1x8x128xf32>,
    %43 = arith.extui %10 : vector<8x128xi1> to vector<8x128xi32>
    %44 = arith.sitofp %43 : vector<8x128xi32> to vector<8x128xf32>
    %c0_36 = arith.constant 0 : index
    %c0_37 = arith.constant 0 : index
    %c0_38 = arith.constant 0 : index
    %c0_39 = arith.constant 0 : index
    %45 = vector.load %arg8[%c0_36, %c0_37, %c0_38, %c0_39] : memref<1x1x8x128xf32, #tpu.memory_space<vmem>>, vector<1x1x8x128xf32>
    %46 = vector.shape_cast %45 : vector<1x1x8x128xf32> to vector<8x128xf32>
    %47 = vector.shape_cast %44 : vector<8x128xf32> to vector<1x8x128xf32>
    %cst_40 = arith.constant dense<0.000000e+00> : vector<8x128xf32>
    %48 = vector.multi_reduction <add>, %47, %cst_40 [0] : vector<1x8x128xf32> to vector<8x128xf32>
    %49 = arith.addf %46, %48 : vector<8x128xf32>
    %c0_41 = arith.constant 0 : index
    %c0_42 = arith.constant 0 : index
    %c0_43 = arith.constant 0 : index
    %c0_44 = arith.constant 0 : index
    %50 = vector.load %arg8[%c0_41, %c0_42, %c0_43, %c0_44] : memref<1x1x8x128xf32, #tpu.memory_space<vmem>>, vector<1x1x8x128xf32>
    %51 = vector.shape_cast %50 : vector<1x1x8x128xf32> to vector<8x128xf32>
    %52 = vector.shape_cast %49 : vector<8x128xf32> to vector<1x1x8x128xf32>
    tpu.vector_store %arg8[%c0_41, %c0_42, %c0_43, %c0_44], %52 {strides = array<i32>} : memref<1x1x8x128xf32, #tpu.memory_space<vmem>>, vector<1x1x8x128xf32>,
    return
  }
  func.func @transform_0(%arg0: i32, %arg1: i32, %arg2: i32) -> (i32, i32, i32) {
    %c1_i32 = arith.constant 1 : i32
    %0 = arith.muli %arg1, %c1_i32 : i32
    %1 = arith.addi %0, %arg2 : i32
    %c0_i32 = arith.constant 0 : i32
    %c0_i32_0 = arith.constant 0 : i32
    return %arg0, %1, %c0_i32 : i32, i32, i32
  }
  func.func @transform_1(%arg0: i32, %arg1: i32, %arg2: i32) -> (i32, i32, i32) {
    %c1_i32 = arith.constant 1 : i32
    %0 = arith.muli %arg1, %c1_i32 : i32
    %1 = arith.addi %0, %arg2 : i32
    %c0_i32 = arith.constant 0 : i32
    %c0_i32_0 = arith.constant 0 : i32
    return %arg0, %1, %c0_i32 : i32, i32, i32
  }
  func.func @transform_2(%arg0: i32, %arg1: i32, %arg2: i32) -> (i32, i32, i32, i32) {
    %c0_i32 = arith.constant 0 : i32
    %c0_i32_0 = arith.constant 0 : i32
    %c0_i32_1 = arith.constant 0 : i32
    return %arg0, %arg1, %c0_i32, %c0_i32_0 : i32, i32, i32, i32
  }
  func.func @transform_3(%arg0: i32, %arg1: i32, %arg2: i32) -> (i32, i32, i32, i32) {
    %c0_i32 = arith.constant 0 : i32
    %c0_i32_0 = arith.constant 0 : i32
    %c0_i32_1 = arith.constant 0 : i32
    return %arg0, %arg1, %c0_i32, %c0_i32_0 : i32, i32, i32, i32
  }
  func.func @transform_4(%arg0: i32, %arg1: i32, %arg2: i32) -> (i32, i32, i32, i32) {
    %c0_i32 = arith.constant 0 : i32
    %c0_i32_0 = arith.constant 0 : i32
    %c0_i32_1 = arith.constant 0 : i32
    return %arg0, %arg1, %c0_i32, %c0_i32_0 : i32, i32, i32, i32
  }
  func.func @transform_5(%arg0: i32, %arg1: i32, %arg2: i32) -> (i32, i32, i32, i32) {
    %c0_i32 = arith.constant 0 : i32
    %c0_i32_0 = arith.constant 0 : i32
    %c0_i32_1 = arith.constant 0 : i32
    return %arg0, %arg1, %c0_i32, %c0_i32_0 : i32, i32, i32, i32
  }
}

</mosaic_0001>

<llo_original>
// kernel: tpu_custom_call.1
$region0: #{tpu_custom_call.1}
  #allocation0 [shape = 'u32[]', space=smem, size = 0x4, offset = 0x4, fixed_abs, tag = 'smem constant byte address 0x4 - core index']
  #allocation1 [shape = 'u32[72,128]{1,0:T(1,128)}', space=vmem, size = 0x9000, scoped, tag = 'internal scratch']
  %s0 = inlined_call_operand.hbm [shape: f32[2,8,128], index: 0, kind: input, shape index: {}]
  %s1 = inlined_call_operand.hbm [shape: f32[2,8,128], index: 1, kind: input, shape index: {}]
  %s2 = inlined_call_operand.hbm [shape: f32[2,1,8,128], index: 2, kind: output, shape index: {0}]
  %s3 = inlined_call_operand.hbm [shape: f32[2,1,8,128], index: 3, kind: output, shape index: {1}]
  %s4 = inlined_call_operand.hbm [shape: f32[2,1,8,128], index: 4, kind: output, shape index: {2}]
  %s5 = inlined_call_operand.hbm [shape: f32[2,1,8,128], index: 5, kind: output, shape index: {3}]
  %6 = xla_tuple %s2, %s3, %s4, %s5
  %s7 = sld [smem:[#allocation0]]
  $region77: #{tpu_custom_call.1} parent=0
    _
  %s9 = ssub.s32 1, %s7
  %s10 = scalar_select 0, %s9, %s7
  $region1: #{tpu_custom_call.1} parent=0
    #allocation2 [shape = 'u8[8192]{0}', space=vmem, size = 0x2000, scoped, tag = 'input window, operand 0']
    #allocation3 [shape = 's32[2]{0}', space=sflag, size = 0x8, scoped, tag = 'scoped memory for tpu_custom_call.1']
    #allocation4 [shape = 's32[2]{0}', space=sflag, size = 0x8, scoped, tag = 'scoped memory for tpu_custom_call.1']
    #allocation5 [shape = 'u8[8192]{0}', space=vmem, size = 0x2000, scoped, tag = 'input window, operand 1']
    #allocation6 [shape = 's32[2]{0}', space=sflag, size = 0x8, scoped, tag = 'scoped memory for tpu_custom_call.1']
    #allocation7 [shape = 'u8[8192]{0}', space=vmem, size = 0x2000, scoped, tag = 'output window, operand 0']
    #allocation8 [shape = 'u8[8192]{0}', space=vmem, size = 0x2000, scoped, tag = 'output window, operand 1']
    #allocation9 [shape = 's32[2]{0}', space=sflag, size = 0x8, scoped, tag = 'scoped memory for tpu_custom_call.1']
    #allocation10 [shape = 'u8[8192]{0}', space=vmem, size = 0x2000, scoped, tag = 'output window, operand 2']
    #allocation11 [shape = 'u8[8192]{0}', space=vmem, size = 0x2000, scoped, tag = 'output window, operand 3']
    #allocation12 [shape = 's32[2]{0}', space=sflag, size = 0x8, scoped, tag = 'scoped memory for tpu_custom_call.1']
    %11 = vsyncpa [#allocation3], 0
    %s12 = scalar_lea.sflag [#allocation3], 1
    %13 = vsyncpa %s12, 0
    %14 = vsyncpa [#allocation6], 0
    %s15 = scalar_lea.sflag [#allocation6], 1
    %16 = vsyncpa %s15, 0
    %17 = vsyncpa [#allocation4], 0
    %s18 = scalar_lea.sflag [#allocation4], 1
    %19 = vsyncpa %s18, 0
    %20 = vsyncpa [#allocation9], 0
    %s21 = scalar_lea.sflag [#allocation9], 1
    %22 = vsyncpa %s21, 0
    %23 = vsyncpa [#allocation12], 0
    %s24 = scalar_lea.sflag [#allocation12], 1
    %25 = vsyncpa %s24, 0
    loop: start=0, step=1, limit=4
    $region2: #{tpu_custom_call.1} parent=1 // loop_pre_header
      _
    $region3: #{tpu_custom_call.1} parent=1 // loop_header
      %s27 = sphi 0, %s31
      %p28 = scmp.ge.s32.totalorder %s27, 4
      %s34 = sphi 0, %s53
      %s35 = sphi 0, %s49
      %s36 = sphi 0, %s45
      %s37 = sphi 0, %s34
      %s38 = sphi 0, %s35
      %s39 = sphi 0, %s36
      %s40 = sphi 0, %s37
      %s41 = sphi 0, %s38
      %s42 = sphi 0, %s39
      %s60 = sphi 0, %s62
      %s63 = sphi 0, %s60
      %s64 = sphi 0, %s63
      %s80 = sphi 0, %s64
      %s90 = sphi 0, %s92
      %s93 = sphi 0, %s90
      %s94 = sphi 0, %s93
      %s110 = sphi 0, %s94
      %s118 = sphi 0, %s120
      %s121 = sphi 0, %s118
      %s122 = sphi 0, %s121
      %s138 = sphi 0, %s122
      %s146 = sphi 0, %s148
      %s149 = sphi 0, %s146
      %s150 = sphi 0, %s149
      %s166 = sphi 0, %s150
      %s174 = sphi 0, %s176
      %s177 = sphi 0, %s174
      %s178 = sphi 0, %s177
      %s194 = sphi 0, %s178
      %s202 = sphi 0, %s204
      %s205 = sphi 0, %s202
      %s206 = sphi 0, %s205
      %s222 = sphi 0, %s206
    $region4: #{tpu_custom_call.1} parent=1 // loop_header_branch
      %30 = sbr.rel (%p28) target = $region8
    $region5: #{tpu_custom_call.1} parent=1 // loop_body
      %s32 = ssub.s32 %s27, 1
      %s33 = ssub.s32 %s27, 2
      %s43 = sadd.s32 1, %s36
      %p44 = scmp.ge.s32.totalorder %s43, 1
      %s45 = scalar_select %p44, 0, %s43
      %s46 = sadd.s32 1, %s35
      %s47 = scalar_select %p44, %s46, %s35
      %p48 = scmp.ge.s32.totalorder %s47, 1
      %s49 = scalar_select %p48, 0, %s47
      %s50 = sadd.s32 1, %s34
      %s51 = scalar_select %p48, %s50, %s34
      %p52 = scmp.ge.s32.totalorder %s51, 2
      %s53 = scalar_select %p52, 0, %s51
      %s54 = sadd.s32 %s35, %s36
      %s55 = sadd.s32 %s49, %s45
      %s56 = ssub.s32 %s34, %s53
      %s57 = ssub.s32 %s54, %s55
      %s58 = sor.u32 %s56, %s57
      %p59 = scmp.eq.s32.totalorder %s58, 0
      %s61 = sadd.s32 %s60, 1
      %s62 = scalar_select %p59, %s60, %s61
      %p65 = pneg %p59
      %p66 = scmp.eq.s32.totalorder %s27, 1
      %p67 = por %p65, %p66
      %p68 = scmp.ne.s32.totalorder %s60, %s63
      %p69 = scmp.eq.s32.totalorder %s27, 0
      %p70 = por %p68, %p69
      %p71 = scmp.ne.s32.totalorder %s60, %s63
      %p72 = scmp.eq.s32.totalorder %s32, 1
      %p73 = por %p71, %p72
      %p74 = scmp.ne.s32.totalorder %s63, %s64
      %p75 = scmp.eq.s32.totalorder %s32, 0
      %p76 = por %p74, %p75
      %p77 = scmp.ne.s32.totalorder %s63, %s64
      %p78 = scmp.eq.s32.totalorder %s33, 1
      %p79 = por %p77, %p78
      %p81 = scmp.ne.s32.totalorder %s64, %s80
      %p82 = scmp.eq.s32.totalorder %s33, 0
      %p83 = por %p81, %p82
      %s84 = sadd.s32 %s35, %s36
      %s85 = sadd.s32 %s49, %s45
      %s86 = ssub.s32 %s34, %s53
      %s87 = ssub.s32 %s84, %s85
      %s88 = sor.u32 %s86, %s87
      %p89 = scmp.eq.s32.totalorder %s88, 0
      %s91 = sadd.s32 %s90, 1
      %s92 = scalar_select %p89, %s90, %s91
      %p95 = pneg %p89
      %p96 = scmp.eq.s32.totalorder %s27, 1
      %p97 = por %p95, %p96
      %p98 = scmp.ne.s32.totalorder %s90, %s93
      %p99 = scmp.eq.s32.totalorder %s27, 0
      %p100 = por %p98, %p99
      %p101 = scmp.ne.s32.totalorder %s90, %s93
      %p102 = scmp.eq.s32.totalorder %s32, 1
      %p103 = por %p101, %p102
      %p104 = scmp.ne.s32.totalorder %s93, %s94
      %p105 = scmp.eq.s32.totalorder %s32, 0
      %p106 = por %p104, %p105
      %p107 = scmp.ne.s32.totalorder %s93, %s94
      %p108 = scmp.eq.s32.totalorder %s33, 1
      %p109 = por %p107, %p108
      %p111 = scmp.ne.s32.totalorder %s94, %s110
      %p112 = scmp.eq.s32.totalorder %s33, 0
      %p113 = por %p111, %p112
      %s114 = ssub.s32 %s34, %s53
      %s115 = ssub.s32 %s35, %s49
      %s116 = sor.u32 %s114, %s115
      %p117 = scmp.eq.s32.totalorder %s116, 0
      %s119 = sadd.s32 %s118, 1
      %s120 = scalar_select %p117, %s118, %s119
      %p123 = pneg %p117
      %p124 = scmp.eq.s32.totalorder %s27, 1
      %p125 = por %p123, %p124
      %p126 = scmp.ne.s32.totalorder %s118, %s121
      %p127 = scmp.eq.s32.totalorder %s27, 0
      %p128 = por %p126, %p127
      %p129 = scmp.ne.s32.totalorder %s118, %s121
      %p130 = scmp.eq.s32.totalorder %s32, 1
      %p131 = por %p129, %p130
      %p132 = scmp.ne.s32.totalorder %s121, %s122
      %p133 = scmp.eq.s32.totalorder %s32, 0
      %p134 = por %p132, %p133
      %p135 = scmp.ne.s32.totalorder %s121, %s122
      %p136 = scmp.eq.s32.totalorder %s33, 1
      %p137 = por %p135, %p136
      %p139 = scmp.ne.s32.totalorder %s122, %s138
      %p140 = scmp.eq.s32.totalorder %s33, 0
      %p141 = por %p139, %p140
      %s142 = ssub.s32 %s34, %s53
      %s143 = ssub.s32 %s35, %s49
      %s144 = sor.u32 %s142, %s143
      %p145 = scmp.eq.s32.totalorder %s144, 0
      %s147 = sadd.s32 %s146, 1
      %s148 = scalar_select %p145, %s146, %s147
      %p151 = pneg %p145
      %p152 = scmp.eq.s32.totalorder %s27, 1
      %p153 = por %p151, %p152
      %p154 = scmp.ne.s32.totalorder %s146, %s149
      %p155 = scmp.eq.s32.totalorder %s27, 0
      %p156 = por %p154, %p155
      %p157 = scmp.ne.s32.totalorder %s146, %s149
      %p158 = scmp.eq.s32.totalorder %s32, 1
      %p159 = por %p157, %p158
      %p160 = scmp.ne.s32.totalorder %s149, %s150
      %p161 = scmp.eq.s32.totalorder %s32, 0
      %p162 = por %p160, %p161
      %p163 = scmp.ne.s32.totalorder %s149, %s150
      %p164 = scmp.eq.s32.totalorder %s33, 1
      %p165 = por %p163, %p164
      %p167 = scmp.ne.s32.totalorder %s150, %s166
      %p168 = scmp.eq.s32.totalorder %s33, 0
      %p169 = por %p167, %p168
      %s170 = ssub.s32 %s34, %s53
      %s171 = ssub.s32 %s35, %s49
      %s172 = sor.u32 %s170, %s171
      %p173 = scmp.eq.s32.totalorder %s172, 0
      %s175 = sadd.s32 %s174, 1
      %s176 = scalar_select %p173, %s174, %s175
      %p179 = pneg %p173
      %p180 = scmp.eq.s32.totalorder %s27, 1
      %p181 = por %p179, %p180
      %p182 = scmp.ne.s32.totalorder %s174, %s177
      %p183 = scmp.eq.s32.totalorder %s27, 0
      %p184 = por %p182, %p183
      %p185 = scmp.ne.s32.totalorder %s174, %s177
      %p186 = scmp.eq.s32.totalorder %s32, 1
      %p187 = por %p185, %p186
      %p188 = scmp.ne.s32.totalorder %s177, %s178
      %p189 = scmp.eq.s32.totalorder %s32, 0
      %p190 = por %p188, %p189
      %p191 = scmp.ne.s32.totalorder %s177, %s178
      %p192 = scmp.eq.s32.totalorder %s33, 1
      %p193 = por %p191, %p192
      %p195 = scmp.ne.s32.totalorder %s178, %s194
      %p196 = scmp.eq.s32.totalorder %s33, 0
      %p197 = por %p195, %p196
      %s198 = ssub.s32 %s34, %s53
      %s199 = ssub.s32 %s35, %s49
      %s200 = sor.u32 %s198, %s199
      %p201 = scmp.eq.s32.totalorder %s200, 0
      %s203 = sadd.s32 %s202, 1
      %s204 = scalar_select %p201, %s202, %s203
      %p207 = pneg %p201
      %p208 = scmp.eq.s32.totalorder %s27, 1
      %p209 = por %p207, %p208
      %p210 = scmp.ne.s32.totalorder %s202, %s205
      %p211 = scmp.eq.s32.totalorder %s27, 0
      %p212 = por %p210, %p211
      %p213 = scmp.ne.s32.totalorder %s202, %s205
      %p214 = scmp.eq.s32.totalorder %s32, 1
      %p215 = por %p213, %p214
      %p216 = scmp.ne.s32.totalorder %s205, %s206
      %p217 = scmp.eq.s32.totalorder %s32, 0
      %p218 = por %p216, %p217
      %p219 = scmp.ne.s32.totalorder %s205, %s206
      %p220 = scmp.eq.s32.totalorder %s33, 1
      %p221 = por %p219, %p220
      %p223 = scmp.ne.s32.totalorder %s206, %s222
      %p224 = scmp.eq.s32.totalorder %s33, 0
      %p225 = por %p223, %p224
      %p226 = scmp.le.s32.totalorder 1, %s27
      %p227 = scmp.lt.s32.totalorder %s27, 3
      %p228 = pnand %p226, %p227
      %p229 = pneg %p228
      // Predicated region
      $region9: #{tpu_custom_call.1} parent=5 // pred_check
        _
      $region10: #{tpu_custom_call.1} parent=5 // pred_check_branch
        %231 = sbr.rel (%p228) target = $region12
      $region11: #{tpu_custom_call.1} parent=5 // pred_region
        %s232 = ssub.s32 %s27, 1
      $region12: #{tpu_custom_call.1} parent=5 // pred_fallthru
        _
      %p233 = scmp.lt.s32.totalorder %s27, 2
      // Predicated region
      $region13: #{tpu_custom_call.1} parent=5 // pred_check
        %p234 = pneg %p233
      $region14: #{tpu_custom_call.1} parent=5 // pred_check_branch
        %236 = sbr.rel (%p234) target = $region16
      $region15: #{tpu_custom_call.1} parent=5 // pred_region
        // Predicated region
        $region17: #{tpu_custom_call.1} parent=15 // pred_check
          %p237 = pneg %p70
        $region18: #{tpu_custom_call.1} parent=15 // pred_check_branch
          %239 = sbr.rel (%p237) target = $region20
        $region19: #{tpu_custom_call.1} parent=15 // pred_region
          %s240 = sand.u32 %s60, 1
          %s241 = scalar_lea.sflag [#allocation3], %s240
          %s242 = sand.u32 %s60, 1
          %s243 = smul.addr %s242, 8
          %s244 = scalar_lea.vmem [#allocation2], %s243
          %s245 = sadd.s32 %s35, %s36
          %247 = vsyncadd %s241, 0
          %s248 = sadd.s32 %s245, %s34
          %s249 = smul.addr %s248, 8
          %s250 = scalar_lea.hbm %s0, %s249
          %s252 = sshll.u32 %s250, 4
          %s253 = int_to_ptr.hbm [resolvable:$true] %s252
          %s254 = sshll.u32 %s244, 4
          %s255 = int_to_ptr.vmem [resolvable:$true] %s254
          %257 = dma.hbm_to_vmem [thread:$0]  %s253, 128, %s255, %s241
        $region20: #{tpu_custom_call.1} parent=15 // pred_fallthru
          _
        // Predicated region
        $region21: #{tpu_custom_call.1} parent=15 // pred_check
          %p258 = pneg %p100
        $region22: #{tpu_custom_call.1} parent=15 // pred_check_branch
          %260 = sbr.rel (%p258) target = $region24
        $region23: #{tpu_custom_call.1} parent=15 // pred_region
          %s261 = sand.u32 %s90, 1
          %s262 = scalar_lea.sflag [#allocation6], %s261
          %s263 = sand.u32 %s90, 1
          %s264 = smul.addr %s263, 8
          %s265 = scalar_lea.vmem [#allocation5], %s264
          %s266 = sadd.s32 %s35, %s36
          %268 = vsyncadd %s262, 0
          %s269 = sadd.s32 %s266, %s34
          %s270 = smul.addr %s269, 8
          %s271 = scalar_lea.hbm %s1, %s270
          %s273 = sshll.u32 %s271, 4
          %s274 = int_to_ptr.hbm [resolvable:$true] %s273
          %s275 = sshll.u32 %s265, 4
          %s276 = int_to_ptr.vmem [resolvable:$true] %s275
          %278 = dma.hbm_to_vmem [thread:$0]  %s274, 128, %s276, %s262
        $region24: #{tpu_custom_call.1} parent=15 // pred_fallthru
          _
      $region16: #{tpu_custom_call.1} parent=5 // pred_fallthru
        _
      %p279 = scmp.le.s32.totalorder 1, %s27
      %p280 = scmp.lt.s32.totalorder %s27, 3
      %p281 = pnand %p279, %p280
      %p282 = pneg %p281
      // Predicated region
      $region25: #{tpu_custom_call.1} parent=5 // pred_check
        _
      $region26: #{tpu_custom_call.1} parent=5 // pred_check_branch
        %284 = sbr.rel (%p281) target = $region28
      $region27: #{tpu_custom_call.1} parent=5 // pred_region
        %s285 = ssub.s32 %s27, 1
        %s286 = sand.u32 %s63, 1
        %s287 = scalar_lea.sflag [#allocation3], %s286
        %s288 = sand.u32 %s63, 1
        %s289 = smul.addr %s288, 8
        %s290 = scalar_lea.vmem [#allocation2], %s289
        // Predicated region
        $region29: #{tpu_custom_call.1} parent=27 // pred_check
          %p291 = pneg %p76
        $region30: #{tpu_custom_call.1} parent=27 // pred_check_branch
          %293 = sbr.rel (%p291) target = $region32
        $region31: #{tpu_custom_call.1} parent=27 // pred_region
          %295 = dma.done %s287, 128
        $region32: #{tpu_custom_call.1} parent=27 // pred_fallthru
          _
        %s296 = sand.u32 %s93, 1
        %s297 = scalar_lea.sflag [#allocation6], %s296
        %s298 = sand.u32 %s93, 1
        %s299 = smul.addr %s298, 8
        %s300 = scalar_lea.vmem [#allocation5], %s299
        // Predicated region
        $region33: #{tpu_custom_call.1} parent=27 // pred_check
          %p301 = pneg %p106
        $region34: #{tpu_custom_call.1} parent=27 // pred_check_branch
          %303 = sbr.rel (%p301) target = $region36
        $region35: #{tpu_custom_call.1} parent=27 // pred_region
          %305 = dma.done %s297, 128
        $region36: #{tpu_custom_call.1} parent=27 // pred_fallthru
          _
        %s306 = sand.u32 %s63, 1
        %s307 = scalar_lea.sflag [#allocation3], %s306
        %s308 = sand.u32 %s63, 1
        %s309 = smul.addr %s308, 8
        %s310 = scalar_lea.vmem [#allocation2], %s309
        %p311 = pneg %p76
        %p312 = pneg %p73
        %s313 = sand.u32 %s93, 1
        %s314 = scalar_lea.sflag [#allocation6], %s313
        %s315 = sand.u32 %s93, 1
        %s316 = smul.addr %s315, 8
        %s317 = scalar_lea.vmem [#allocation5], %s316
        %p318 = pneg %p106
        %p319 = pneg %p103
        %p320 = pneg %p134
        %p321 = pneg %p131
        %s322 = sand.u32 %s121, 1
        %s323 = scalar_lea.sflag [#allocation4], %s322
        %s324 = sand.u32 %s121, 1
        %s325 = smul.addr %s324, 8
        %s326 = scalar_lea.vmem [#allocation7], %s325
        %p327 = pneg %p162
        %p328 = pneg %p159
        %s329 = sand.u32 %s32, 1
        %s330 = scalar_lea.sflag [#allocation9], %s329
        %s331 = sand.u32 %s149, 1
        %s332 = smul.addr %s331, 8
        %s333 = scalar_lea.vmem [#allocation8], %s332
        %p334 = pneg %p190
        %p335 = pneg %p187
        %s336 = sand.u32 %s32, 1
        %s337 = scalar_lea.sflag [#allocation9], %s336
        %s338 = sand.u32 %s177, 1
        %s339 = smul.addr %s338, 8
        %s340 = scalar_lea.vmem [#allocation10], %s339
        %p341 = pneg %p218
        %p342 = pneg %p215
        %s343 = sand.u32 %s205, 1
        %s344 = scalar_lea.sflag [#allocation12], %s343
        %s345 = sand.u32 %s205, 1
        %s346 = smul.addr %s345, 8
        %s347 = scalar_lea.vmem [#allocation11], %s346
        %s348 = sadd.s32 %s38, %s39
        %s349 = sadd.s32 %s38, %s39
        %p350 = scmp.eq.s32.totalorder %s39, 0
        // Predicated region
        $region37: #{tpu_custom_call.1} parent=27 // pred_check
          %p351 = pneg %p350
        $region38: #{tpu_custom_call.1} parent=27 // pred_check_branch
          %353 = sbr.rel (%p351) target = $region40
        $region39: #{tpu_custom_call.1} parent=27 // pred_region
          %354 = vst [vmem:[%s326] sm:$0xff] 0.0
          %355 = vst [vmem:[%s333] sm:$0xff] 0.0
          %356 = vst [vmem:[%s340] sm:$0xff] 0.0
          %357 = vst [vmem:[%s347] sm:$0xff] 0.0
        $region40: #{tpu_custom_call.1} parent=27 // pred_fallthru
          _
        %v358 = vld [vmem:[%s290] sm:$0xff]
        %v359 = vld [vmem:[%s300] sm:$0xff]
        %vm360 = vcmp.eq.f32.partialorder %v359, 1.0
        %vm361 = vcmp.eq.f32.partialorder %v359, 2.0
        %v362 = vsub.f32 1.0, %v358
        %v363 = vand.u32 2147483647, %v362
        %v364 = vsel %vm360, %v363, 0.0
        %v365 = vld [vmem:[%s326] sm:$0xff]
        %v366 = vadd.f32 %v364, 0.0
        %v367 = vadd.f32 %v365, %v366
        %368 = vst [vmem:[%s326] sm:$0xff] %v367
        %v369 = vsel %vm361, %v363, 0.0
        %v370 = vld [vmem:[%s333] sm:$0xff]
        %v371 = vadd.f32 %v369, 0.0
        %v372 = vadd.f32 %v370, %v371
        %373 = vst [vmem:[%s333] sm:$0xff] %v372
        %v374 = vsel %vm360, 1, 0
        %v375 = vcvt.s32.f32 %v374
        %v376 = vld [vmem:[%s340] sm:$0xff]
        %v377 = vadd.f32 %v375, 0.0
        %v378 = vadd.f32 %v376, %v377
        %379 = vst [vmem:[%s340] sm:$0xff] %v378
        %v380 = vsel %vm361, 1, 0
        %v381 = vcvt.s32.f32 %v380
        %v382 = vld [vmem:[%s347] sm:$0xff]
        %v383 = vadd.f32 %v381, 0.0
        %v384 = vadd.f32 %v382, %v383
        %385 = vst [vmem:[%s347] sm:$0xff] %v384
        %s386 = sand.u32 %s121, 1
        %s387 = scalar_lea.sflag [#allocation4], %s386
        %s388 = sand.u32 %s121, 1
        %s389 = smul.addr %s388, 8
        %s390 = scalar_lea.vmem [#allocation7], %s389
        %s391 = sand.u32 %s32, 1
        %s392 = scalar_lea.sflag [#allocation9], %s391
        %s393 = sand.u32 %s149, 1
        %s394 = smul.addr %s393, 8
        %s395 = scalar_lea.vmem [#allocation8], %s394
        %s396 = sand.u32 %s32, 1
        %s397 = scalar_lea.sflag [#allocation9], %s396
        %s398 = sand.u32 %s177, 1
        %s399 = smul.addr %s398, 8
        %s400 = scalar_lea.vmem [#allocation10], %s399
        %s401 = sand.u32 %s205, 1
        %s402 = scalar_lea.sflag [#allocation12], %s401
        %s403 = sand.u32 %s205, 1
        %s404 = smul.addr %s403, 8
        %s405 = scalar_lea.vmem [#allocation11], %s404
        // Predicated region
        $region41: #{tpu_custom_call.1} parent=27 // pred_check
          %p406 = pneg %p131
        $region42: #{tpu_custom_call.1} parent=27 // pred_check_branch
          %408 = sbr.rel (%p406) target = $region44
        $region43: #{tpu_custom_call.1} parent=27 // pred_region
          %410 = vsyncadd %s387, 0
          %s411 = sadd.s32 %s38, %s37
          %s412 = smul.addr %s411, 8
          %s413 = scalar_lea.hbm %s2, %s412
          %s415 = sshll.u32 %s390, 4
          %s416 = int_to_ptr.vmem [resolvable:$true] %s415
          %s417 = sshll.u32 %s413, 4
          %s418 = int_to_ptr.hbm [resolvable:$true] %s417
          %420 = dma.vmem_to_hbm [thread:$0]  %s416, 128, %s418, %s387
        $region44: #{tpu_custom_call.1} parent=27 // pred_fallthru
          _
        // Predicated region
        $region45: #{tpu_custom_call.1} parent=27 // pred_check
          %p421 = pneg %p159
        $region46: #{tpu_custom_call.1} parent=27 // pred_check_branch
          %423 = sbr.rel (%p421) target = $region48
        $region47: #{tpu_custom_call.1} parent=27 // pred_region
          %425 = vsyncadd %s392, 0
          %s426 = sadd.s32 %s38, %s37
          %s427 = smul.addr %s426, 8
          %s428 = scalar_lea.hbm %s3, %s427
          %s430 = sshll.u32 %s395, 4
          %s431 = int_to_ptr.vmem [resolvable:$true] %s430
          %s432 = sshll.u32 %s428, 4
          %s433 = int_to_ptr.hbm [resolvable:$true] %s432
          %435 = dma.vmem_to_hbm [thread:$0]  %s431, 128, %s433, %s392
        $region48: #{tpu_custom_call.1} parent=27 // pred_fallthru
          _
        // Predicated region
        $region49: #{tpu_custom_call.1} parent=27 // pred_check
          %p436 = pneg %p187
        $region50: #{tpu_custom_call.1} parent=27 // pred_check_branch
          %438 = sbr.rel (%p436) target = $region52
        $region51: #{tpu_custom_call.1} parent=27 // pred_region
          %440 = vsyncadd %s397, 0
          %s441 = sadd.s32 %s38, %s37
          %s442 = smul.addr %s441, 8
          %s443 = scalar_lea.hbm %s4, %s442
          %s445 = sshll.u32 %s400, 4
          %s446 = int_to_ptr.vmem [resolvable:$true] %s445
          %s447 = sshll.u32 %s443, 4
          %s448 = int_to_ptr.hbm [resolvable:$true] %s447
          %450 = dma.vmem_to_hbm [thread:$0]  %s446, 128, %s448, %s397
        $region52: #{tpu_custom_call.1} parent=27 // pred_fallthru
          _
        // Predicated region
        $region53: #{tpu_custom_call.1} parent=27 // pred_check
          %p451 = pneg %p215
        $region54: #{tpu_custom_call.1} parent=27 // pred_check_branch
          %453 = sbr.rel (%p451) target = $region56
        $region55: #{tpu_custom_call.1} parent=27 // pred_region
          %455 = vsyncadd %s402, 0
          %s456 = sadd.s32 %s38, %s37
          %s457 = smul.addr %s456, 8
          %s458 = scalar_lea.hbm %s5, %s457
          %s460 = sshll.u32 %s405, 4
          %s461 = int_to_ptr.vmem [resolvable:$true] %s460
          %s462 = sshll.u32 %s458, 4
          %s463 = int_to_ptr.hbm [resolvable:$true] %s462
          %465 = dma.vmem_to_hbm [thread:$0]  %s461, 128, %s463, %s402
        $region56: #{tpu_custom_call.1} parent=27 // pred_fallthru
          _
      $region28: #{tpu_custom_call.1} parent=5 // pred_fallthru
        _
      %p466 = scmp.le.s32.totalorder 2, %s27
      // Predicated region
      $region57: #{tpu_custom_call.1} parent=5 // pred_check
        %p467 = pneg %p466
      $region58: #{tpu_custom_call.1} parent=5 // pred_check_branch
        %469 = sbr.rel (%p467) target = $region60
      $region59: #{tpu_custom_call.1} parent=5 // pred_region
        %s470 = ssub.s32 %s27, 2
        // Predicated region
        $region61: #{tpu_custom_call.1} parent=59 // pred_check
          %p471 = pneg %p137
        $region62: #{tpu_custom_call.1} parent=59 // pred_check_branch
          %473 = sbr.rel (%p471) target = $region64
        $region63: #{tpu_custom_call.1} parent=59 // pred_region
          %s474 = sand.u32 %s122, 1
          %s475 = scalar_lea.sflag [#allocation4], %s474
          %s476 = sand.u32 %s122, 1
          %s477 = smul.addr %s476, 8
          %s478 = scalar_lea.vmem [#allocation7], %s477
          %480 = dma.done %s475, 128
        $region64: #{tpu_custom_call.1} parent=59 // pred_fallthru
          _
        // Predicated region
        $region65: #{tpu_custom_call.1} parent=59 // pred_check
          %p481 = pneg %p165
        $region66: #{tpu_custom_call.1} parent=59 // pred_check_branch
          %483 = sbr.rel (%p481) target = $region68
        $region67: #{tpu_custom_call.1} parent=59 // pred_region
          %s484 = sand.u32 %s33, 1
          %s485 = scalar_lea.sflag [#allocation9], %s484
          %s486 = sand.u32 %s150, 1
          %s487 = smul.addr %s486, 8
          %s488 = scalar_lea.vmem [#allocation8], %s487
          %490 = dma.done %s485, 128
        $region68: #{tpu_custom_call.1} parent=59 // pred_fallthru
          _
        // Predicated region
        $region69: #{tpu_custom_call.1} parent=59 // pred_check
          %p491 = pneg %p193
        $region70: #{tpu_custom_call.1} parent=59 // pred_check_branch
          %493 = sbr.rel (%p491) target = $region72
        $region71: #{tpu_custom_call.1} parent=59 // pred_region
          %s494 = sand.u32 %s33, 1
          %s495 = scalar_lea.sflag [#allocation9], %s494
          %s496 = sand.u32 %s178, 1
          %s497 = smul.addr %s496, 8
          %s498 = scalar_lea.vmem [#allocation10], %s497
          %500 = dma.done %s495, 128
        $region72: #{tpu_custom_call.1} parent=59 // pred_fallthru
          _
        // Predicated region
        $region73: #{tpu_custom_call.1} parent=59 // pred_check
          %p501 = pneg %p221
        $region74: #{tpu_custom_call.1} parent=59 // pred_check_branch
          %503 = sbr.rel (%p501) target = $region76
        $region75: #{tpu_custom_call.1} parent=59 // pred_region
          %s504 = sand.u32 %s206, 1
          %s505 = scalar_lea.sflag [#allocation12], %s504
          %s506 = sand.u32 %s206, 1
          %s507 = smul.addr %s506, 8
          %s508 = scalar_lea.vmem [#allocation11], %s507
          %510 = dma.done %s505, 128
        $region76: #{tpu_custom_call.1} parent=59 // pred_fallthru
          _
      $region60: #{tpu_custom_call.1} parent=5 // pred_fallthru
        _
    $region6: #{tpu_custom_call.1} parent=1 // loop_footer
      %s31 = sadd.s32 1, %s27
    $region7: #{tpu_custom_call.1} parent=1 // loop_footer_branch
      %26 = sbr.rel target = $region3
    $region8: #{tpu_custom_call.1} parent=1 // loop_exit
      _
    %511 = vsyncpa [#allocation3], 1
    %s512 = scalar_lea.sflag [#allocation3], 1
    %513 = vsyncpa %s512, 1
    %514 = vsyncpa [#allocation6], 1
    %s515 = scalar_lea.sflag [#allocation6], 1
    %516 = vsyncpa %s515, 1
    %517 = vsyncpa [#allocation4], 1
    %s518 = scalar_lea.sflag [#allocation4], 1
    %519 = vsyncpa %s518, 1
    %520 = vsyncpa [#allocation9], 1
    %s521 = scalar_lea.sflag [#allocation9], 1
    %522 = vsyncpa %s521, 1
    %523 = vsyncpa [#allocation12], 1
    %s524 = scalar_lea.sflag [#allocation12], 1
    %525 = vsyncpa %s524, 1

</llo_original>
